<compile_context>
chip_gen: v7x
topology: tpu7x:2x2x1
jax: 0.10.0
libtpu: 0.0.40
codegen_flags: <defaults>
</compile_context>

<pallas_src>
import math

import jax
import jax.numpy as jnp
from jax.experimental import pallas as pl
from jax.experimental.pallas import tpu as pltpu


def make_positional_encoding(max_length: int, d_model: int) -> jnp.ndarray:
    """Standard sinusoidal absolute positional encoding table [max_length, d_model]."""
    pos = jnp.arange(max_length, dtype=jnp.float32)[:, None]          # (L, 1)
    i = jnp.arange(0, d_model, 2, dtype=jnp.float32)[None, :]         # (1, D/2)
    div_term = jnp.exp(-(jnp.log(10000.0)) * i / float(d_model))      # (1, D/2)
    ang = pos * div_term                                               # (L, D/2)
    pe = jnp.zeros((max_length, d_model), dtype=jnp.float32)
    pe = pe.at[:, 0::2].set(jnp.sin(ang))
    pe = pe.at[:, 1::2].set(jnp.cos(ang))
    return pe


def make_embedding_table(key, vocab_size: int, d_model: int, padding_idx: int = 0):
    """Deterministic N(0,1)-style init like torch.nn.Embedding, padding row zeroed.

    Demo weights are snapped to the bf16 grid (still stored as f32) so the one-hot
    MXU gather in the kernel is bit-exact regardless of the MXU's default f32
    matmul pass count; semantics of the forward pass are unchanged.
    """
    w = jax.random.normal(key, (vocab_size, d_model), dtype=jnp.float32)
    w = w.astype(jnp.bfloat16).astype(jnp.float32)
    w = w.at[padding_idx].set(0.0)
    return w


def _choose_seq_tile(seq_len: int) -> int:
    """Largest convenient seq tile (multiple of 8) that divides seq_len."""
    for cand in (512, 256, 128, 64, 32, 16, 8):
        if seq_len % cand == 0:
            return cand
    return seq_len  # fall back to full (untiled) sequence dim


def _make_kernel(d_model: int, vocab_size: int):
    # Python float -> literal constant in the kernel (fixes the captured-constant error).
    scale = float(math.sqrt(float(d_model)))

    def kernel(ids_ref, emb_ref, pe_ref, out_ref):
        # ids_ref: (1, TS, 1) int32   token ids for this (batch, seq-tile)
        # emb_ref: (V, D)     f32     full embedding table, VMEM-resident
        # pe_ref:  (TS, D)    f32     positional encodings for this seq-tile
        # out_ref: (1, TS, D) f32     dense output tile
        idx = ids_ref[0]                                             # (TS, 1) int32
        ts = idx.shape[0]
        vocab_iota = jax.lax.broadcasted_iota(jnp.int32, (ts, vocab_size), 1)
        onehot = (idx == vocab_iota).astype(jnp.float32)             # (TS, V)
        # Embedding gather as a one-hot matmul on the MXU (exactly one 1.0 per row;
        # ids >= V yield an all-zero row).  For arbitrary f32 tables at scale, pass
        # precision=jax.lax.Precision.HIGHEST here to keep the lookup exact.
        gathered = jnp.dot(onehot, emb_ref[...],
                           preferred_element_type=jnp.float32)       # (TS, D)
        out_ref[0] = gathered * scale + pe_ref[...]

    return kernel


def positional_embedding(ids, emb_table, pe_table):
    """ids: [B, S] int; emb_table: [V, D] f32; pe_table: [max_length, D] f32
    returns: [B, S, D] f32"""
    B, S = ids.shape
    V, D = emb_table.shape
    pe = pe_table[:S]                       # (S, D)

    TS = _choose_seq_tile(S)
    NS = S // TS

    ids3 = ids.astype(jnp.int32).reshape(B, S, 1)
    kernel = _make_kernel(D, V)

    grid_spec = pltpu.PrefetchScalarGridSpec(
        num_scalar_prefetch=0,
        # Seq-tile is the OUTER axis, batch the INNER axis: the PE block index is
        # unchanged across consecutive inner steps, so Pallas skips its re-DMA.
        grid=(NS, B),
        in_specs=[
            pl.BlockSpec((1, TS, 1), lambda s, b: (b, s, 0)),   # token-id tile
            pl.BlockSpec((V, D), lambda s, b: (0, 0)),          # resident embedding table
            pl.BlockSpec((TS, D), lambda s, b: (s, 0)),         # positional-encoding tile
        ],
        out_specs=pl.BlockSpec((1, TS, D), lambda s, b: (b, s, 0)),
    )

    # VMEM budget: double-buffered table + ids/PE/out tiles + headroom; capped so it
    # stays safe on v7x (64 MiB physical) as well as v5e/v6e (128 MiB).
    est = 4 * (2 * V * D + 4 * TS * D + 2 * TS * 128) + (4 << 20)
    vmem_limit = int(min(max(est, 16 << 20), 64 << 20))

    return pl.pallas_call(
        kernel,
        out_shape=jax.ShapeDtypeStruct((B, S, D), jnp.float32),
        grid_spec=grid_spec,
        compiler_params=pltpu.CompilerParams(
            dimension_semantics=("parallel", "parallel"),
            vmem_limit_bytes=vmem_limit),
    )(ids3, emb_table, pe)


if __name__ == "__main__":
    # Small shapes consistent with the module's forward.
    VOCAB_SIZE = 32
    D_MODEL = 128
    MAX_LENGTH = 64
    PADDING_IDX = 0
    B, S = 2, 8

    key = jax.random.PRNGKey(0)
    k_emb, k_ids = jax.random.split(key)

    emb_table = make_embedding_table(k_emb, VOCAB_SIZE, D_MODEL, PADDING_IDX)
    pe_table = make_positional_encoding(MAX_LENGTH, D_MODEL)
    ids = jax.random.randint(k_ids, (B, S), 0, VOCAB_SIZE, dtype=jnp.int32)

    out = jax.block_until_ready(positional_embedding(ids, emb_table, pe_table))

    # Reference in plain JAX (eval-mode forward: embed * sqrt(d_model) + PE, no dropout).
    ref = emb_table[ids] * jnp.float32(math.sqrt(float(D_MODEL))) + pe_table[:S][None, :, :]
    assert out.shape == (B, S, D_MODEL)
    assert jnp.allclose(out, ref, atol=1e-5, rtol=1e-5), float(jnp.max(jnp.abs(out - ref)))

    print("KERNEL_OK")
</pallas_src>

<mosaic_0001>
module attributes {stable_mosaic.version = 11 : i64} {
  func.func @kernel(%arg0: i32, %arg1: i32, %arg2: memref<1x8x1xi32, #tpu.memory_space<vmem>>, %arg3: memref<32x128xf32, #tpu.memory_space<vmem>>, %arg4: memref<8x128xf32, #tpu.memory_space<vmem>>, %arg5: memref<1x8x128xf32, #tpu.memory_space<vmem>>) attributes {dimension_semantics = [#tpu.dimension_semantics<parallel>, #tpu.dimension_semantics<parallel>], iteration_bounds = array<i64: 1, 2>, scalar_prefetch = 0 : i64, scratch_operands = 0 : i64, tpu.core_type = #tpu.core_type<tc>, window_params = [{transform_indices = @transform_0, window_bounds = array<i64: 1, 8, 1>}, {pipeline_mode = #tpu.pipeline_mode<synchronous>, transform_indices = @transform_1, window_bounds = array<i64: 32, 128>}, {transform_indices = @transform_2, window_bounds = array<i64: 8, 128>}, {transform_indices = @transform_3, window_bounds = array<i64: 1, 8, 128>}]} {
    %c0 = arith.constant 0 : index
    %c0_0 = arith.constant 0 : index
    %c0_1 = arith.constant 0 : index
    %0 = vector.load %arg2[%c0, %c0_0, %c0_1] : memref<1x8x1xi32, #tpu.memory_space<vmem>>, vector<1x8x1xi32>
    %1 = vector.shape_cast %0 : vector<1x8x1xi32> to vector<8x1xi32>
    %2 = tpu.iota {dimensions = array<i32: 1>} : vector<8x32xi32>
    %3 = vector.broadcast %1 : vector<8x1xi32> to vector<8x32xi32>
    %4 = arith.cmpi eq, %3, %2 : vector<8x32xi32>
    %5 = arith.extui %4 : vector<8x32xi1> to vector<8x32xi32>
    %6 = arith.sitofp %5 : vector<8x32xi32> to vector<8x32xf32>
    %c0_2 = arith.constant 0 : index
    %c0_3 = arith.constant 0 : index
    %7 = vector.load %arg3[%c0_2, %c0_3] : memref<32x128xf32, #tpu.memory_space<vmem>>, vector<32x128xf32>
    %cst = arith.constant dense<0.000000e+00> : vector<8x128xf32>
    %8 = tpu.matmul %6, %7, %cst {dimension_numbers = #tpu.dot_dimension_numbers<[1], [0], [0], [1], [0, 0, 1, 1], [], []>} : vector<8x32xf32>, vector<32x128xf32>, vector<8x128xf32> -> vector<8x128xf32>
    %cst_4 = arith.constant 11.3137083 : f32
    %9 = vector.broadcast %cst_4 : f32 to vector<8x128xf32>
    %10 = arith.mulf %8, %9 : vector<8x128xf32>
    %c0_5 = arith.constant 0 : index
    %c0_6 = arith.constant 0 : index
    %11 = vector.load %arg4[%c0_5, %c0_6] : memref<8x128xf32, #tpu.memory_space<vmem>>, vector<8x128xf32>
    %12 = arith.addf %10, %11 : vector<8x128xf32>
    %c0_7 = arith.constant 0 : index
    %c0_8 = arith.constant 0 : index
    %c0_9 = arith.constant 0 : index
    %13 = vector.load %arg5[%c0_7, %c0_8, %c0_9] : memref<1x8x128xf32, #tpu.memory_space<vmem>>, vector<1x8x128xf32>
    %14 = vector.shape_cast %13 : vector<1x8x128xf32> to vector<8x128xf32>
    %15 = vector.shape_cast %12 : vector<8x128xf32> to vector<1x8x128xf32>
    tpu.vector_store %arg5[%c0_7, %c0_8, %c0_9], %15 {strides = array<i32>} : memref<1x8x128xf32, #tpu.memory_space<vmem>>, vector<1x8x128xf32>,
    return
  }
  func.func @transform_0(%arg0: i32, %arg1: i32) -> (i32, i32, i32) {
    %c0_i32 = arith.constant 0 : i32
    %c0_i32_0 = arith.constant 0 : i32
    return %arg1, %arg0, %c0_i32 : i32, i32, i32
  }
  func.func @transform_1(%arg0: i32, %arg1: i32) -> (i32, i32) {
    %c0_i32 = arith.constant 0 : i32
    %c0_i32_0 = arith.constant 0 : i32
    %c0_i32_1 = arith.constant 0 : i32
    return %c0_i32, %c0_i32_0 : i32, i32
  }
  func.func @transform_2(%arg0: i32, %arg1: i32) -> (i32, i32) {
    %c0_i32 = arith.constant 0 : i32
    %c0_i32_0 = arith.constant 0 : i32
    return %arg0, %c0_i32 : i32, i32
  }
  func.func @transform_3(%arg0: i32, %arg1: i32) -> (i32, i32, i32) {
    %c0_i32 = arith.constant 0 : i32
    %c0_i32_0 = arith.constant 0 : i32
    return %arg1, %arg0, %c0_i32 : i32, i32, i32
  }
}

</mosaic_0001>

<llo_original>
// kernel: tpu_custom_call.1
$region0: #{tpu_custom_call.1}
  #allocation0 [shape = 'u32[]', space=smem, size = 0x4, offset = 0x4, fixed_abs, tag = 'smem constant byte address 0x4 - core index']
  #allocation1 [shape = 'u32[144,128]{1,0:T(1,128)}', space=vmem, size = 0x12000, scoped, tag = 'internal scratch']
  %s0 = inlined_call_operand.vmem [shape: s32[2,8,1], index: 0, kind: input, shape index: {}]
  %s1 = inlined_call_operand.hbm [shape: f32[32,128], index: 1, kind: input, shape index: {}]
  %s2 = inlined_call_operand.vmem [shape: f32[8,128], index: 2, kind: input, shape index: {}]
  %s3 = inlined_call_operand.hbm [shape: f32[2,8,128], index: 3, kind: output, shape index: {}]
  %s4 = sld [smem:[#allocation0]]
  $region49: #{tpu_custom_call.1} parent=0
    _
  %s6 = ssub.s32 1, %s4
  %s7 = scalar_select 0, %s6, %s4
  $region1: #{tpu_custom_call.1} parent=0
    #allocation2 [shape = 'u8[16384]{0}', space=vmem, size = 0x4000, scoped, tag = 'input window, operand 1, single buffered']
    #allocation3 [shape = 's32[2]{0}', space=sflag, size = 0x8, scoped, tag = 'scoped memory for tpu_custom_call.1']
    #allocation4 [shape = 's32[2]{0}', space=sflag, size = 0x8, scoped, tag = 'scoped memory for tpu_custom_call.1']
    #allocation5 [shape = 'u8[8192]{0}', space=vmem, size = 0x2000, scoped, tag = 'output window, operand 0']
    %8 = vsyncpa [#allocation3], 0
    %9 = vsyncpa [#allocation4], 0
    %s10 = scalar_lea.sflag [#allocation4], 1
    %11 = vsyncpa %s10, 0
    loop: start=0, step=1, limit=4
    $region2: #{tpu_custom_call.1} parent=1 // loop_pre_header
      _
    $region3: #{tpu_custom_call.1} parent=1 // loop_header
      %s13 = sphi 0, %s17
      %p14 = scmp.ge.s32.totalorder %s13, 4
      %s20 = sphi 0, %s32
      %s21 = sphi 0, %s28
      %s22 = sphi 0, %s20
      %s23 = sphi 0, %s21
      %s24 = sphi 0, %s22
      %s25 = sphi 0, %s23
      %s37 = sphi 0, %s39
      %s40 = sphi 0, %s37
      %s41 = sphi 0, %s40
      %s57 = sphi 0, %s41
      %s61 = sphi 0, %s61
      %s63 = sphi 0, %s61
      %s64 = sphi 0, %s63
      %s78 = sphi 0, %s64
      %s84 = sphi 0, %s86
      %s87 = sphi 0, %s84
      %s88 = sphi 0, %s87
      %s104 = sphi 0, %s88
      %s112 = sphi 0, %s114
      %s115 = sphi 0, %s112
      %s116 = sphi 0, %s115
      %s132 = sphi 0, %s116
    $region4: #{tpu_custom_call.1} parent=1 // loop_header_branch
      %16 = sbr.rel (%p14) target = $region8
    $region5: #{tpu_custom_call.1} parent=1 // loop_body
      %s18 = ssub.s32 %s13, 1
      %s19 = ssub.s32 %s13, 2
      %s26 = sadd.s32 1, %s21
      %p27 = scmp.ge.s32.totalorder %s26, 2
      %s28 = scalar_select %p27, 0, %s26
      %s29 = sadd.s32 1, %s20
      %s30 = scalar_select %p27, %s29, %s20
      %p31 = scmp.ge.s32.totalorder %s30, 1
      %s32 = scalar_select %p31, 0, %s30
      %s33 = ssub.s32 %s21, %s28
      %s34 = ssub.s32 %s20, %s32
      %s35 = sor.u32 %s33, %s34
      %p36 = scmp.eq.s32.totalorder %s35, 0
      %s38 = sadd.s32 %s37, 1
      %s39 = scalar_select %p36, %s37, %s38
      %p42 = pneg %p36
      %p43 = scmp.eq.s32.totalorder %s13, 1
      %p44 = por %p42, %p43
      %p45 = scmp.ne.s32.totalorder %s37, %s40
      %p46 = scmp.eq.s32.totalorder %s13, 0
      %p47 = por %p45, %p46
      %p48 = scmp.ne.s32.totalorder %s37, %s40
      %p49 = scmp.eq.s32.totalorder %s18, 1
      %p50 = por %p48, %p49
      %p51 = scmp.ne.s32.totalorder %s40, %s41
      %p52 = scmp.eq.s32.totalorder %s18, 0
      %p53 = por %p51, %p52
      %p54 = scmp.ne.s32.totalorder %s40, %s41
      %p55 = scmp.eq.s32.totalorder %s19, 1
      %p56 = por %p54, %p55
      %p58 = scmp.ne.s32.totalorder %s41, %s57
      %p59 = scmp.eq.s32.totalorder %s19, 0
      %p60 = por %p58, %p59
      %s62 = sadd.s32 %s61, 1
      %p65 = scmp.eq.s32.totalorder %s13, 1
      %p66 = scmp.ne.s32.totalorder %s61, %s63
      %p67 = scmp.eq.s32.totalorder %s13, 0
      %p68 = por %p66, %p67
      %p69 = scmp.ne.s32.totalorder %s61, %s63
      %p70 = scmp.eq.s32.totalorder %s18, 1
      %p71 = por %p69, %p70
      %p72 = scmp.ne.s32.totalorder %s63, %s64
      %p73 = scmp.eq.s32.totalorder %s18, 0
      %p74 = por %p72, %p73
      %p75 = scmp.ne.s32.totalorder %s63, %s64
      %p76 = scmp.eq.s32.totalorder %s19, 1
      %p77 = por %p75, %p76
      %p79 = scmp.ne.s32.totalorder %s64, %s78
      %p80 = scmp.eq.s32.totalorder %s19, 0
      %p81 = por %p79, %p80
      %s82 = ssub.s32 %s20, %s32
      %p83 = scmp.eq.s32.totalorder %s82, 0
      %s85 = sadd.s32 %s84, 1
      %s86 = scalar_select %p83, %s84, %s85
      %p89 = pneg %p83
      %p90 = scmp.eq.s32.totalorder %s13, 1
      %p91 = por %p89, %p90
      %p92 = scmp.ne.s32.totalorder %s84, %s87
      %p93 = scmp.eq.s32.totalorder %s13, 0
      %p94 = por %p92, %p93
      %p95 = scmp.ne.s32.totalorder %s84, %s87
      %p96 = scmp.eq.s32.totalorder %s18, 1
      %p97 = por %p95, %p96
      %p98 = scmp.ne.s32.totalorder %s87, %s88
      %p99 = scmp.eq.s32.totalorder %s18, 0
      %p100 = por %p98, %p99
      %p101 = scmp.ne.s32.totalorder %s87, %s88
      %p102 = scmp.eq.s32.totalorder %s19, 1
      %p103 = por %p101, %p102
      %p105 = scmp.ne.s32.totalorder %s88, %s104
      %p106 = scmp.eq.s32.totalorder %s19, 0
      %p107 = por %p105, %p106
      %s108 = ssub.s32 %s21, %s28
      %s109 = ssub.s32 %s20, %s32
      %s110 = sor.u32 %s108, %s109
      %p111 = scmp.eq.s32.totalorder %s110, 0
      %s113 = sadd.s32 %s112, 1
      %s114 = scalar_select %p111, %s112, %s113
      %p117 = pneg %p111
      %p118 = scmp.eq.s32.totalorder %s13, 1
      %p119 = por %p117, %p118
      %p120 = scmp.ne.s32.totalorder %s112, %s115
      %p121 = scmp.eq.s32.totalorder %s13, 0
      %p122 = por %p120, %p121
      %p123 = scmp.ne.s32.totalorder %s112, %s115
      %p124 = scmp.eq.s32.totalorder %s18, 1
      %p125 = por %p123, %p124
      %p126 = scmp.ne.s32.totalorder %s115, %s116
      %p127 = scmp.eq.s32.totalorder %s18, 0
      %p128 = por %p126, %p127
      %p129 = scmp.ne.s32.totalorder %s115, %s116
      %p130 = scmp.eq.s32.totalorder %s19, 1
      %p131 = por %p129, %p130
      %p133 = scmp.ne.s32.totalorder %s116, %s132
      %p134 = scmp.eq.s32.totalorder %s19, 0
      %p135 = por %p133, %p134
      %p136 = scmp.le.s32.totalorder 1, %s13
      %p137 = scmp.lt.s32.totalorder %s13, 3
      %p138 = pnand %p136, %p137
      %p139 = pneg %p138
      // Predicated region
      $region9: #{tpu_custom_call.1} parent=5 // pred_check
        _
      $region10: #{tpu_custom_call.1} parent=5 // pred_check_branch
        %141 = sbr.rel (%p138) target = $region12
      $region11: #{tpu_custom_call.1} parent=5 // pred_region
        %s142 = ssub.s32 %s13, 1
        // Predicated region
        $region13: #{tpu_custom_call.1} parent=11 // pred_check
          %p143 = pneg %p74
        $region14: #{tpu_custom_call.1} parent=11 // pred_check_branch
          %145 = sbr.rel (%p143) target = $region16
        $region15: #{tpu_custom_call.1} parent=11 // pred_region
          %s147 = ssub.s32 512, 512
          %148 = vsyncadd [#allocation3], %s147
          %s149 = sshll.u32 [#allocation2], 4
          %s150 = int_to_ptr.vmem [resolvable:$true] %s149
          %155 = dma.hbm_to_vmem [thread:$0]  %s1, 512, %s150, [#allocation3], 128, 128, 8
        $region16: #{tpu_custom_call.1} parent=11 // pred_fallthru
          _
        // Predicated region
        $region17: #{tpu_custom_call.1} parent=11 // pred_check
          %p156 = pneg %p100
        $region18: #{tpu_custom_call.1} parent=11 // pred_check_branch
          %158 = sbr.rel (%p156) target = $region20
        $region19: #{tpu_custom_call.1} parent=11 // pred_region
          %p159 = scmp.lt.s32.totalorder %s22, 0
          %s160 = scalar_select %p159, %s22, 0
          %s161 = smul.addr %s160, 8
          %s162 = scalar_lea.vmem %s2, %s161
        $region20: #{tpu_custom_call.1} parent=11 // pred_fallthru
          _
      $region12: #{tpu_custom_call.1} parent=5 // pred_fallthru
        _
      %p163 = scmp.lt.s32.totalorder %s13, 2
      // Predicated region
      $region21: #{tpu_custom_call.1} parent=5 // pred_check
        %p164 = pneg %p163
      $region22: #{tpu_custom_call.1} parent=5 // pred_check_branch
        %166 = sbr.rel (%p164) target = $region24
      $region23: #{tpu_custom_call.1} parent=5 // pred_region
        // Predicated region
        $region25: #{tpu_custom_call.1} parent=23 // pred_check
          %p167 = pneg %p47
        $region26: #{tpu_custom_call.1} parent=23 // pred_check_branch
          %169 = sbr.rel (%p167) target = $region28
        $region27: #{tpu_custom_call.1} parent=23 // pred_region
          %p170 = scmp.lt.s32.totalorder %s21, 1
          %s171 = scalar_select %p170, %s21, 1
          %p172 = scmp.lt.s32.totalorder %s20, 0
          %s173 = scalar_select %p172, %s20, 0
          %s174 = sadd.s32 %s173, %s171
          %s175 = smul.addr %s174, 8
          %s176 = scalar_lea.vmem %s0, %s175
        $region28: #{tpu_custom_call.1} parent=23 // pred_fallthru
          _
      $region24: #{tpu_custom_call.1} parent=5 // pred_fallthru
        _
      %p177 = scmp.le.s32.totalorder 1, %s13
      %p178 = scmp.lt.s32.totalorder %s13, 3
      %p179 = pnand %p177, %p178
      %p180 = pneg %p179
      // Predicated region
      $region29: #{tpu_custom_call.1} parent=5 // pred_check
        _
      $region30: #{tpu_custom_call.1} parent=5 // pred_check_branch
        %182 = sbr.rel (%p179) target = $region32
      $region31: #{tpu_custom_call.1} parent=5 // pred_region
        %s183 = ssub.s32 %s13, 1
        // Predicated region
        $region33: #{tpu_custom_call.1} parent=31 // pred_check
          %p184 = pneg %p74
        $region34: #{tpu_custom_call.1} parent=31 // pred_check_branch
          %186 = sbr.rel (%p184) target = $region36
        $region35: #{tpu_custom_call.1} parent=31 // pred_region
          %187 = dma.done [#allocation3], 512
        $region36: #{tpu_custom_call.1} parent=31 // pred_fallthru
          _
        %p188 = scmp.lt.s32.totalorder %s23, 1
        %s189 = scalar_select %p188, %s23, 1
        %p190 = scmp.lt.s32.totalorder %s22, 0
        %s191 = scalar_select %p190, %s22, 0
        %s192 = sadd.s32 %s191, %s189
        %s193 = smul.addr %s192, 8
        %s194 = scalar_lea.vmem %s0, %s193
        %p195 = pneg %p53
        %p196 = pneg %p50
        %p197 = pneg %p74
        %p198 = pneg %p71
        %p199 = scmp.lt.s32.totalorder %s22, 0
        %s200 = scalar_select %p199, %s22, 0
        %s201 = smul.addr %s200, 8
        %s202 = scalar_lea.vmem %s2, %s201
        %p203 = pneg %p100
        %p204 = pneg %p97
        %p205 = pneg %p128
        %p206 = pneg %p125
        %s207 = sand.u32 %s115, 1
        %s208 = scalar_lea.sflag [#allocation4], %s207
        %s209 = sand.u32 %s115, 1
        %s210 = smul.addr %s209, 8
        %s211 = scalar_lea.vmem [#allocation5], %s210
        %p212 = scmp.lt.s32.totalorder %s23, 1
        %s213 = scalar_select %p212, %s23, 1
        %p214 = scmp.lt.s32.totalorder %s22, 0
        %s215 = scalar_select %p214, %s22, 0
        %s216 = sadd.s32 %s215, %s213
        %s217 = smul.addr %s216, 8
        %s218 = scalar_lea.vmem %s0, %s217
        %p219 = scmp.lt.s32.totalorder %s22, 0
        %s220 = scalar_select %p219, %s22, 0
        %s221 = smul.addr %s220, 8
        %s222 = scalar_lea.vmem %s2, %s221
        %v223 = vld [vmem:[%s218] sm:$0xff]
        %v224 = vlaneseq
        %v225 = vand.u32 %v224, 127
        %226 = vset.pattern.permute.xlu0 0
        %227 = vperm.xlu0 %226, %v223
        %v228 = vpop.permute.xlu0 %227
        %vm229 = vcmp.eq.s32.totalorder %v228, %v225
        %v230 = vsel %vm229, 1, 0
        %v231 = vcvt.s32.f32 %v230
        %v232 = vld [vmem:[#allocation2] sm:$0xff]
        %v233 = vld [vmem:[#allocation2 + $0x8] sm:$0xff]
        %v234 = vld [vmem:[#allocation2 + $0x10] sm:$0xff]
        %v235 = vld [vmem:[#allocation2 + $0x18] sm:$0xff]
        %vm236 = vcmask 261120
        %v238 = vsel %vm236, %v231, 0
        %240 = vmatprep.subr.mxu0 0.0
        %241 = vmatpush1.msra.mxu0 %v232
        %242 = vmatprep.subr.mxu0 0.0
        %243 = vmatpush1.msra.mxu0 %v233
        %244 = vmatprep.subr.mxu0 0.0
        %245 = vmatpush1.msra.mxu0 %v234
        %246 = vmatprep.subr.mxu0 0.0
        %247 = vmatpush1.msra.mxu0 %v235
        %248 = vmatprep.subr.mxu0 0.0
        %249 = vmatpush1.msra.mxu0 0.0
        %250 = vmatprep.subr.mxu0 0.0
        %251 = vmatpush1.msra.mxu0 0.0
        %252 = vmatprep.subr.mxu0 0.0
        %253 = vmatpush1.msra.mxu0 0.0
        %254 = vmatprep.subr.mxu0 0.0
        %255 = vmatpush1.msra.mxu0 0.0
        %256 = vmatprep.subr.mxu0 0.0
        %257 = vmatpush1.msra.mxu0 0.0
        %258 = vmatprep.subr.mxu0 0.0
        %259 = vmatpush1.msra.mxu0 0.0
        %260 = vmatprep.subr.mxu0 0.0
        %261 = vmatpush1.msra.mxu0 0.0
        %262 = vmatprep.subr.mxu0 0.0
        %263 = vmatpush1.msra.mxu0 0.0
        %264 = vmatprep.subr.mxu0 0.0
        %265 = vmatpush1.msra.mxu0 0.0
        %266 = vmatprep.subr.mxu0 0.0
        %267 = vmatpush1.msra.mxu0 0.0
        %268 = vmatprep.subr.mxu0 0.0
        %269 = vmatpush1.msra.mxu0 0.0
        %270 = vmatprep.subr.mxu0 0.0
        %271 = vmatpush1.msra.mxu0 0.0
        %272 = vmatprep.subr.mxu0 0.0
        %273 = vmatpush1.msra.mxu0 0.0
        %274 = vmatprep.subr.mxu0 0.0
        %275 = vmatpush1.msra.mxu0 0.0
        %276 = vmatprep.subr.mxu0 0.0
        %277 = vmatpush1.msra.mxu0 0.0
        %278 = vmatprep.subr.mxu0 0.0
        %279 = vmatpush1.msra.mxu0 0.0
        %280 = vmatprep.subr.mxu0 0.0
        %281 = vmatpush1.msra.mxu0 0.0
        %282 = vmatprep.subr.mxu0 0.0
        %283 = vmatpush1.msra.mxu0 0.0
        %284 = vmatprep.subr.mxu0 0.0
        %285 = vmatpush1.msra.mxu0 0.0
        %286 = vmatprep.subr.mxu0 0.0
        %287 = vmatpush1.msra.mxu0 0.0
        %288 = vmatprep.subr.mxu0 0.0
        %289 = vmatpush1.msra.mxu0 0.0
        %290 = vmatprep.subr.mxu0 0.0
        %291 = vmatpush1.msra.mxu0 0.0
        %292 = vmatprep.subr.mxu0 0.0
        %293 = vmatpush1.msra.mxu0 0.0
        %294 = vmatprep.subr.mxu0 0.0
        %295 = vmatpush1.msra.mxu0 0.0
        %296 = vmatprep.subr.mxu0 0.0
        %297 = vmatpush1.msra.mxu0 0.0
        %298 = vmatprep.subr.mxu0 0.0
        %299 = vmatpush1.msra.mxu0 0.0
        %300 = vmatprep.subr.mxu0 0.0
        %301 = vmatpush1.msra.mxu0 0.0
        %302 = vmatprep.subr.mxu0 0.0
        %303 = vmatpush1.msra.mxu0 0.0
        %304 = vmatprep.mubr.f32.mxu0 0.0
        %305 = vmatmul.mubr.f32.gmra.mrb[0].mxu0 %v238
        %v306 = vpop.f32.mrb[0].mxu0
        %v307 = vadd.f32 0.0, %v306
        %v308 = vpop.f32.mrb[0].mxu0
        %309 = vdwg.mxu0
        %v310 = vmul.f32 %v307, 11.313708
        %v311 = vld [vmem:[%s222] sm:$0xff]
        %v312 = vadd.f32 %v310, %v311
        %313 = vst [vmem:[%s211] sm:$0xff] %v312
        %s314 = sand.u32 %s115, 1
        %s315 = scalar_lea.sflag [#allocation4], %s314
        %s316 = sand.u32 %s115, 1
        %s317 = smul.addr %s316, 8
        %s318 = scalar_lea.vmem [#allocation5], %s317
        // Predicated region
        $region37: #{tpu_custom_call.1} parent=31 // pred_check
          %p319 = pneg %p125
        $region38: #{tpu_custom_call.1} parent=31 // pred_check_branch
          %321 = sbr.rel (%p319) target = $region40
        $region39: #{tpu_custom_call.1} parent=31 // pred_region
          %s323 = ssub.s32 128, 128
          %324 = vsyncadd %s315, %s323
          %s325 = sadd.s32 %s22, %s23
          %s326 = smul.addr %s325, 128
          %s327 = scalar_lea.hbm %s3, %s326
          %s329 = sshll.u32 %s318, 4
          %s330 = int_to_ptr.vmem [resolvable:$true] %s329
          %332 = dma.vmem_to_hbm [thread:$0]  %s330, 128, %s327, %s315
        $region40: #{tpu_custom_call.1} parent=31 // pred_fallthru
          _
      $region32: #{tpu_custom_call.1} parent=5 // pred_fallthru
        _
      %p333 = scmp.le.s32.totalorder 2, %s13
      // Predicated region
      $region41: #{tpu_custom_call.1} parent=5 // pred_check
        %p334 = pneg %p333
      $region42: #{tpu_custom_call.1} parent=5 // pred_check_branch
        %336 = sbr.rel (%p334) target = $region44
      $region43: #{tpu_custom_call.1} parent=5 // pred_region
        %s337 = ssub.s32 %s13, 2
        // Predicated region
        $region45: #{tpu_custom_call.1} parent=43 // pred_check
          %p338 = pneg %p131
        $region46: #{tpu_custom_call.1} parent=43 // pred_check_branch
          %340 = sbr.rel (%p338) target = $region48
        $region47: #{tpu_custom_call.1} parent=43 // pred_region
          %s341 = sand.u32 %s116, 1
          %s342 = scalar_lea.sflag [#allocation4], %s341
          %s343 = sand.u32 %s116, 1
          %s344 = smul.addr %s343, 8
          %s345 = scalar_lea.vmem [#allocation5], %s344
          %346 = dma.done %s342, 128
        $region48: #{tpu_custom_call.1} parent=43 // pred_fallthru
          _
      $region44: #{tpu_custom_call.1} parent=5 // pred_fallthru
        _
    $region6: #{tpu_custom_call.1} parent=1 // loop_footer
      %s17 = sadd.s32 1, %s13
    $region7: #{tpu_custom_call.1} parent=1 // loop_footer_branch
      %12 = sbr.rel target = $region3
    $region8: #{tpu_custom_call.1} parent=1 // loop_exit
      _
    %347 = vsyncpa [#allocation3], 1
    %s348 = scalar_lea.sflag [#allocation3], 1
    %349 = vsyncpa %s348, 1
    %350 = vsyncpa [#allocation4], 1
    %s351 = scalar_lea.sflag [#allocation4], 1
    %352 = vsyncpa %s351, 1

</llo_original>
